<compile_context>
chip_gen: v5e
topology: v5e:2x2
jax: 0.10.0
libtpu: 0.0.40
codegen_flags: <defaults>
</compile_context>

<pallas_src>
import functools

import jax
import jax.numpy as jnp
from jax import lax
from jax.experimental import pallas as pl
from jax.experimental.pallas import tpu as pltpu

_UNROLL = 5  # static inner unroll inside the fori_loop (divides n_iters=50)


def _lmd_forward_kernel(ss_ref, x_ref, w_ref, q_ref, c_ref, o_ref, *,
                        n_iters, unroll):
    # Loop-invariant operands, hoisted once (~6 vregs of f32 at [8, 256]).
    w = w_ref[...]               # param_weights          [NI, P] f32
    wc = w * c_ref[...]          # param_weights * c      [NI, P] f32

    # fwd is carried in vregs across the whole loop; single o_ref write at end.
    fwd0 = x_ref[...]

    def one_step(i, fwd):
        ss = ss_ref[i]           # scalar stepsize from SMEM (dynamic index OK)
        # Off-critical-chain work: independent of the MXU result, so the
        # scheduler can overlap it with the matmul traversal.
        sw = ss * w              # ss * param_weights
        base = fwd + ss * wc     # fwd + ss * param_weights * c
        # gradFun(fwd) = fwd @ Q - c, folded into the update below.
        # bf16 MXU operands, f32 accumulation.  Q load kept inside the body so
        # regalloc is not forced to pin ~32 vregs of Q across the loop.
        matres = jnp.dot(
            fwd.astype(jnp.bfloat16),
            q_ref[...],
            preferred_element_type=jnp.float32,
        )
        # fwd - ss*w*(fwd@Q - c)  ==  (fwd + ss*w*c) - (ss*w)*(fwd@Q)
        return base - sw * matres

    n_main = (n_iters // unroll) * unroll

    def outer_body(step, fwd):
        base_i = step * unroll
        for j in range(unroll):          # static inner unroll
            fwd = one_step(base_i + j, fwd)
        return fwd

    fwd = lax.fori_loop(0, n_iters // unroll, outer_body, fwd0)

    # Static tail for n_iters not divisible by the unroll factor.
    for j in range(n_iters - n_main):
        fwd = one_step(n_main + j, fwd)

    o_ref[...] = fwd


@jax.jit
def adhoc_weighted_l2_forward(x, param_weights, stepsize, q_bf16, c):
    """Runs the n_iters preconditioned-gradient-descent loop inside one kernel."""
    num_inits, P = x.shape
    n_iters = stepsize.shape[0]

    # Whole-array VMEM blocks require native (8, 128)-aligned shapes; fail
    # loudly instead of silently picking up masked partial stores.
    if num_inits % 8 != 0 or P % 128 != 0:
        raise ValueError(
            "adhoc_weighted_l2_forward requires num_inits % 8 == 0 and "
            f"P % 128 == 0; got ({num_inits}, {P}). Pad inputs before calling.")
    if q_bf16.dtype != jnp.bfloat16:
        raise ValueError("Pass Q pre-cast to bfloat16 (cast once at the caller).")

    kernel = functools.partial(_lmd_forward_kernel, n_iters=n_iters,
                               unroll=_UNROLL)
    return pl.pallas_call(
        kernel,
        out_shape=jax.ShapeDtypeStruct((num_inits, P), jnp.float32),
        in_specs=[
            pl.BlockSpec(memory_space=pltpu.MemorySpace.SMEM),  # stepsize [n_iters]
            pl.BlockSpec(memory_space=pltpu.MemorySpace.VMEM),  # x        [NI, P] f32
            pl.BlockSpec(memory_space=pltpu.MemorySpace.VMEM),  # weights  [NI, P] f32
            pl.BlockSpec(memory_space=pltpu.MemorySpace.VMEM),  # Q        [P, P]  bf16
            pl.BlockSpec(memory_space=pltpu.MemorySpace.VMEM),  # c        [NI, P] f32
        ],
        out_specs=pl.BlockSpec(memory_space=pltpu.MemorySpace.VMEM),
    )(stepsize, x, param_weights, q_bf16, c)


def _reference_forward(x, param_weights, stepsize, Q, c):
    fwd = x
    for i in range(stepsize.shape[0]):
        grad = fwd @ Q - c
        fwd = fwd - stepsize[i] * (param_weights * grad)
    return fwd


if __name__ == "__main__":
    # Module config (small, consistent with the Omniglot use-case).
    groups = [(4, 1, 3, 3), (8, 4, 3, 3)]          # per-group parameter shapes
    size_array = [(4, 1, 3, 3), (8, 4, 3, 3)]
    num_inits = 8                                  # could be raised to 128-256 for
    n_iters = 50                                   #   nearly-free extra throughput
    P = 256                                        # flattened problem dim (multiple of 128)

    # __init__ parameter setup (deterministic, matches the PyTorch shapes).
    group_params = [jnp.ones(s, jnp.float32) for s in groups]  # unused in forward()
    stepsize = 0.05 * jnp.ones((n_iters,), jnp.float32)

    key = jax.random.PRNGKey(0)
    kx, kw, ka, kt = jax.random.split(key, 4)

    x = jax.random.normal(kx, (num_inits, P), jnp.float32)
    # TODO(synk): `param_weights` is never defined in the original __init__;
    # initialized deterministically here.
    param_weights = jax.random.uniform(kw, (num_inits, P), jnp.float32, 0.5, 1.5)

    # Synthetic quadratic objective for gradFun:  gradFun(v) = v @ Q - c,
    # with Q PSD and spectrum bounded for stability of the 50-step descent.
    A = jax.random.normal(ka, (P, P), jnp.float32) / jnp.sqrt(P)
    Q = (A @ A.T) / 4.0 + 0.1 * jnp.eye(P, dtype=jnp.float32)
    target = jax.random.normal(kt, (num_inits, P), jnp.float32)
    c = target @ Q

    # Cast Q once at the caller (fixed across calls) rather than per call.
    q_bf16 = jax.block_until_ready(Q.astype(jnp.bfloat16))

    out = adhoc_weighted_l2_forward(x, param_weights, stepsize, q_bf16, c)
    out = jax.block_until_ready(out)

    ref = _reference_forward(x, param_weights, stepsize, Q, c)
    assert out.shape == (num_inits, P) and out.dtype == jnp.float32
    assert jnp.allclose(out, ref, rtol=1e-2, atol=1e-2), "mismatch vs reference"

    print("KERNEL_OK")
</pallas_src>

<mosaic_0001>
module attributes {stable_mosaic.version = 11 : i64} {
  func.func @_lmd_forward_kernel(%arg0: memref<50xf32, #tpu.memory_space<smem>>, %arg1: memref<8x256xf32, #tpu.memory_space<vmem>>, %arg2: memref<8x256xf32, #tpu.memory_space<vmem>>, %arg3: memref<256x256xbf16, #tpu.memory_space<vmem>>, %arg4: memref<8x256xf32, #tpu.memory_space<vmem>>, %arg5: memref<8x256xf32, #tpu.memory_space<vmem>>) attributes {dimension_semantics = [], scalar_prefetch = 0 : i64, scratch_operands = 0 : i64, tpu.core_type = #tpu.core_type<tc>} {
    %c0 = arith.constant 0 : index
    %c0_0 = arith.constant 0 : index
    %0 = vector.load %arg2[%c0, %c0_0] : memref<8x256xf32, #tpu.memory_space<vmem>>, vector<8x256xf32>
    %c0_1 = arith.constant 0 : index
    %c0_2 = arith.constant 0 : index
    %1 = vector.load %arg4[%c0_1, %c0_2] : memref<8x256xf32, #tpu.memory_space<vmem>>, vector<8x256xf32>
    %2 = arith.mulf %0, %1 : vector<8x256xf32>
    %c0_3 = arith.constant 0 : index
    %c0_4 = arith.constant 0 : index
    %3 = vector.load %arg1[%c0_3, %c0_4] : memref<8x256xf32, #tpu.memory_space<vmem>>, vector<8x256xf32>
    %c0_i32 = arith.constant 0 : i32
    %c10_i32 = arith.constant 10 : i32
    %4 = arith.addi %c0_i32, %c10_i32 : i32
    %c1_i32 = arith.constant 1 : i32
    %5 = scf.for %arg6 = %c0_i32 to %4 step %c1_i32 iter_args(%arg7 = %3) -> (vector<8x256xf32>)  : i32 {
      %c5_i32 = arith.constant 5 : i32
      %7 = arith.muli %arg6, %c5_i32 : i32
      %c0_i32_8 = arith.constant 0 : i32
      %8 = arith.addi %7, %c0_i32_8 : i32
      %9 = arith.index_cast %8 : i32 to index
      %10 = memref.load %arg0[%9] : memref<50xf32, #tpu.memory_space<smem>>
      %11 = vector.broadcast %10 : f32 to vector<8x256xf32>
      %12 = arith.mulf %11, %0 : vector<8x256xf32>
      %13 = vector.broadcast %10 : f32 to vector<8x256xf32>
      %14 = arith.mulf %13, %2 : vector<8x256xf32>
      %15 = arith.addf %arg7, %14 : vector<8x256xf32>
      %16 = arith.truncf %arg7 : vector<8x256xf32> to vector<8x256xbf16>
      %c0_9 = arith.constant 0 : index
      %c0_10 = arith.constant 0 : index
      %17 = vector.load %arg3[%c0_9, %c0_10] : memref<256x256xbf16, #tpu.memory_space<vmem>>, vector<256x256xbf16>
      %cst = arith.constant dense<0.000000e+00> : vector<8x256xf32>
      %18 = tpu.matmul %16, %17, %cst {dimension_numbers = #tpu.dot_dimension_numbers<[1], [0], [0], [1], [0, 0, 1, 1], [], []>} : vector<8x256xbf16>, vector<256x256xbf16>, vector<8x256xf32> -> vector<8x256xf32>
      %19 = arith.mulf %12, %18 : vector<8x256xf32>
      %20 = arith.subf %15, %19 : vector<8x256xf32>
      %c1_i32_11 = arith.constant 1 : i32
      %21 = arith.addi %7, %c1_i32_11 : i32
      %22 = arith.index_cast %21 : i32 to index
      %23 = memref.load %arg0[%22] : memref<50xf32, #tpu.memory_space<smem>>
      %24 = vector.broadcast %23 : f32 to vector<8x256xf32>
      %25 = arith.mulf %24, %0 : vector<8x256xf32>
      %26 = vector.broadcast %23 : f32 to vector<8x256xf32>
      %27 = arith.mulf %26, %2 : vector<8x256xf32>
      %28 = arith.addf %20, %27 : vector<8x256xf32>
      %29 = arith.truncf %20 : vector<8x256xf32> to vector<8x256xbf16>
      %c0_12 = arith.constant 0 : index
      %c0_13 = arith.constant 0 : index
      %30 = vector.load %arg3[%c0_12, %c0_13] : memref<256x256xbf16, #tpu.memory_space<vmem>>, vector<256x256xbf16>
      %cst_14 = arith.constant dense<0.000000e+00> : vector<8x256xf32>
      %31 = tpu.matmul %29, %30, %cst_14 {dimension_numbers = #tpu.dot_dimension_numbers<[1], [0], [0], [1], [0, 0, 1, 1], [], []>} : vector<8x256xbf16>, vector<256x256xbf16>, vector<8x256xf32> -> vector<8x256xf32>
      %32 = arith.mulf %25, %31 : vector<8x256xf32>
      %33 = arith.subf %28, %32 : vector<8x256xf32>
      %c2_i32 = arith.constant 2 : i32
      %34 = arith.addi %7, %c2_i32 : i32
      %35 = arith.index_cast %34 : i32 to index
      %36 = memref.load %arg0[%35] : memref<50xf32, #tpu.memory_space<smem>>
      %37 = vector.broadcast %36 : f32 to vector<8x256xf32>
      %38 = arith.mulf %37, %0 : vector<8x256xf32>
      %39 = vector.broadcast %36 : f32 to vector<8x256xf32>
      %40 = arith.mulf %39, %2 : vector<8x256xf32>
      %41 = arith.addf %33, %40 : vector<8x256xf32>
      %42 = arith.truncf %33 : vector<8x256xf32> to vector<8x256xbf16>
      %c0_15 = arith.constant 0 : index
      %c0_16 = arith.constant 0 : index
      %43 = vector.load %arg3[%c0_15, %c0_16] : memref<256x256xbf16, #tpu.memory_space<vmem>>, vector<256x256xbf16>
      %cst_17 = arith.constant dense<0.000000e+00> : vector<8x256xf32>
      %44 = tpu.matmul %42, %43, %cst_17 {dimension_numbers = #tpu.dot_dimension_numbers<[1], [0], [0], [1], [0, 0, 1, 1], [], []>} : vector<8x256xbf16>, vector<256x256xbf16>, vector<8x256xf32> -> vector<8x256xf32>
      %45 = arith.mulf %38, %44 : vector<8x256xf32>
      %46 = arith.subf %41, %45 : vector<8x256xf32>
      %c3_i32 = arith.constant 3 : i32
      %47 = arith.addi %7, %c3_i32 : i32
      %48 = arith.index_cast %47 : i32 to index
      %49 = memref.load %arg0[%48] : memref<50xf32, #tpu.memory_space<smem>>
      %50 = vector.broadcast %49 : f32 to vector<8x256xf32>
      %51 = arith.mulf %50, %0 : vector<8x256xf32>
      %52 = vector.broadcast %49 : f32 to vector<8x256xf32>
      %53 = arith.mulf %52, %2 : vector<8x256xf32>
      %54 = arith.addf %46, %53 : vector<8x256xf32>
      %55 = arith.truncf %46 : vector<8x256xf32> to vector<8x256xbf16>
      %c0_18 = arith.constant 0 : index
      %c0_19 = arith.constant 0 : index
      %56 = vector.load %arg3[%c0_18, %c0_19] : memref<256x256xbf16, #tpu.memory_space<vmem>>, vector<256x256xbf16>
      %cst_20 = arith.constant dense<0.000000e+00> : vector<8x256xf32>
      %57 = tpu.matmul %55, %56, %cst_20 {dimension_numbers = #tpu.dot_dimension_numbers<[1], [0], [0], [1], [0, 0, 1, 1], [], []>} : vector<8x256xbf16>, vector<256x256xbf16>, vector<8x256xf32> -> vector<8x256xf32>
      %58 = arith.mulf %51, %57 : vector<8x256xf32>
      %59 = arith.subf %54, %58 : vector<8x256xf32>
      %c4_i32 = arith.constant 4 : i32
      %60 = arith.addi %7, %c4_i32 : i32
      %61 = arith.index_cast %60 : i32 to index
      %62 = memref.load %arg0[%61] : memref<50xf32, #tpu.memory_space<smem>>
      %63 = vector.broadcast %62 : f32 to vector<8x256xf32>
      %64 = arith.mulf %63, %0 : vector<8x256xf32>
      %65 = vector.broadcast %62 : f32 to vector<8x256xf32>
      %66 = arith.mulf %65, %2 : vector<8x256xf32>
      %67 = arith.addf %59, %66 : vector<8x256xf32>
      %68 = arith.truncf %59 : vector<8x256xf32> to vector<8x256xbf16>
      %c0_21 = arith.constant 0 : index
      %c0_22 = arith.constant 0 : index
      %69 = vector.load %arg3[%c0_21, %c0_22] : memref<256x256xbf16, #tpu.memory_space<vmem>>, vector<256x256xbf16>
      %cst_23 = arith.constant dense<0.000000e+00> : vector<8x256xf32>
      %70 = tpu.matmul %68, %69, %cst_23 {dimension_numbers = #tpu.dot_dimension_numbers<[1], [0], [0], [1], [0, 0, 1, 1], [], []>} : vector<8x256xbf16>, vector<256x256xbf16>, vector<8x256xf32> -> vector<8x256xf32>
      %71 = arith.mulf %64, %70 : vector<8x256xf32>
      %72 = arith.subf %67, %71 : vector<8x256xf32>
      scf.yield %72 : vector<8x256xf32>
    }
    %c10_i32_5 = arith.constant 10 : i32
    %c0_6 = arith.constant 0 : index
    %c0_7 = arith.constant 0 : index
    %6 = vector.load %arg5[%c0_6, %c0_7] : memref<8x256xf32, #tpu.memory_space<vmem>>, vector<8x256xf32>
    tpu.vector_store %arg5[%c0_6, %c0_7], %5 {strides = array<i32>} : memref<8x256xf32, #tpu.memory_space<vmem>>, vector<8x256xf32>,
    return
  }
}

</mosaic_0001>

<llo_original>
// kernel: adhoc_weighted_l2_forward.1
$region0: #{adhoc_weighted_l2_forward.1}
  #allocation0 [shape = 'u32[]', space=smem, size = 0x4, offset = 0x4, fixed_abs, tag = 'smem constant byte address 0x4 - core index']
  #allocation1 [shape = 'u32[72,128]{1,0:T(1,128)}', space=vmem, size = 0x9000, scoped, tag = 'internal scratch']
  %s0 = inlined_call_operand.vmem [shape: f32[50], index: 0, kind: input, shape index: {}]
  %s1 = inlined_call_operand.hbm [shape: f32[8,256], index: 1, kind: input, shape index: {}]
  %s2 = inlined_call_operand.hbm [shape: f32[8,256], index: 2, kind: input, shape index: {}]
  %s3 = inlined_call_operand.hbm [shape: bf16[256,256], index: 3, kind: input, shape index: {}]
  %s4 = inlined_call_operand.hbm [shape: f32[8,256], index: 4, kind: input, shape index: {}]
  %s5 = inlined_call_operand.hbm [shape: f32[8,256], index: 5, kind: output, shape index: {}]
  %s6 = sld [smem:[#allocation0]]
  $region57: #{adhoc_weighted_l2_forward.1} parent=0
    _
  %s8 = ssub.s32 1, %s6
  %s9 = scalar_select 0, %s8, %s6
  $region1: #{adhoc_weighted_l2_forward.1} parent=0
    #allocation2 [shape = 'u8[512]{0}', space=smem, size = 0x200, scoped, tag = 'input window, operand 0, single buffered']
    #allocation3 [shape = 's32[1]{0}', space=sflag, size = 0x4, scoped, tag = 'scoped memory for adhoc_weighted_l2_forward.1']
    #allocation4 [shape = 's32[1]{0}', space=sflag, size = 0x4, scoped, tag = 'scoped memory for adhoc_weighted_l2_forward.1']
    #allocation5 [shape = 's32[1]{0}', space=sflag, size = 0x4, scoped, tag = 'scoped memory for adhoc_weighted_l2_forward.1']
    #allocation6 [shape = 'u8[8192]{0}', space=vmem, size = 0x2000, scoped, tag = 'input window, operand 1, single buffered']
    #allocation7 [shape = 'u8[8192]{0}', space=vmem, size = 0x2000, scoped, tag = 'input window, operand 2, single buffered']
    #allocation8 [shape = 's32[1]{0}', space=sflag, size = 0x4, scoped, tag = 'scoped memory for adhoc_weighted_l2_forward.1']
    #allocation9 [shape = 'u8[131072]{0}', space=vmem, size = 0x20000, scoped, tag = 'input window, operand 3, single buffered']
    #allocation10 [shape = 'u8[8192]{0}', space=vmem, size = 0x2000, scoped, tag = 'input window, operand 4, single buffered']
    #allocation11 [shape = 's32[1]{0}', space=sflag, size = 0x4, scoped, tag = 'scoped memory for adhoc_weighted_l2_forward.1']
    #allocation12 [shape = 'u8[8192]{0}', space=vmem, size = 0x2000, scoped, tag = 'output window, operand 0, single buffered']
    %10 = vsyncpa [#allocation5], 0
    %11 = vsyncpa [#allocation3], 0
    %12 = vsyncpa [#allocation8], 0
    %13 = vsyncpa [#allocation11], 0
    %14 = vsyncpa [#allocation4], 0
    // Predicated region
    $region2: #{adhoc_weighted_l2_forward.1} parent=1 // pred_check
      _
    $region3: #{adhoc_weighted_l2_forward.1} parent=1 // pred_check_branch
      %16 = sbr.rel (0) target = $region5
    $region4: #{adhoc_weighted_l2_forward.1} parent=1 // pred_region
      %18 = vsyncadd [#allocation5], 0
      %s20 = sshll.u32 %s0, 4
      %s21 = int_to_ptr.vmem [resolvable:$true] %s20
      %23 = dma.vmem_to_smem %s21, 16, [#allocation2], [#allocation5]
    $region5: #{adhoc_weighted_l2_forward.1} parent=1 // pred_fallthru
      _
    // Predicated region
    $region6: #{adhoc_weighted_l2_forward.1} parent=1 // pred_check
      _
    $region7: #{adhoc_weighted_l2_forward.1} parent=1 // pred_check_branch
      %25 = sbr.rel (0) target = $region9
    $region8: #{adhoc_weighted_l2_forward.1} parent=1 // pred_region
      %27 = vsyncadd [#allocation3], 0
      %s29 = sshll.u32 %s1, 4
      %s30 = int_to_ptr.hbm [resolvable:$true] %s29
      %s31 = sshll.u32 [#allocation6], 4
      %s32 = int_to_ptr.vmem [resolvable:$true] %s31
      %34 = dma.hbm_to_vmem [thread:$0]  %s30, 256, %s32, [#allocation3]
    $region9: #{adhoc_weighted_l2_forward.1} parent=1 // pred_fallthru
      _
    // Predicated region
    $region10: #{adhoc_weighted_l2_forward.1} parent=1 // pred_check
      _
    $region11: #{adhoc_weighted_l2_forward.1} parent=1 // pred_check_branch
      %36 = sbr.rel (0) target = $region13
    $region12: #{adhoc_weighted_l2_forward.1} parent=1 // pred_region
      %38 = vsyncadd [#allocation8], 0
      %s40 = sshll.u32 %s2, 4
      %s41 = int_to_ptr.hbm [resolvable:$true] %s40
      %s42 = sshll.u32 [#allocation7], 4
      %s43 = int_to_ptr.vmem [resolvable:$true] %s42
      %45 = dma.hbm_to_vmem [thread:$0]  %s41, 256, %s43, [#allocation8]
    $region13: #{adhoc_weighted_l2_forward.1} parent=1 // pred_fallthru
      _
    // Predicated region
    $region14: #{adhoc_weighted_l2_forward.1} parent=1 // pred_check
      _
    $region15: #{adhoc_weighted_l2_forward.1} parent=1 // pred_check_branch
      %47 = sbr.rel (0) target = $region17
    $region16: #{adhoc_weighted_l2_forward.1} parent=1 // pred_region
      %49 = vsyncadd [#allocation8], 0
      %s50 = sshll.u32 %s3, 4
      %s51 = int_to_ptr.hbm [resolvable:$true] %s50
      %s52 = sshll.u32 [#allocation9], 4
      %s53 = int_to_ptr.vmem [resolvable:$true] %s52
      %58 = dma.hbm_to_vmem [thread:$0]  %s51, 4096, %s53, [#allocation8], 128, 128, 8
    $region17: #{adhoc_weighted_l2_forward.1} parent=1 // pred_fallthru
      _
    // Predicated region
    $region18: #{adhoc_weighted_l2_forward.1} parent=1 // pred_check
      _
    $region19: #{adhoc_weighted_l2_forward.1} parent=1 // pred_check_branch
      %60 = sbr.rel (0) target = $region21
    $region20: #{adhoc_weighted_l2_forward.1} parent=1 // pred_region
      %62 = vsyncadd [#allocation11], 0
      %s64 = sshll.u32 %s4, 4
      %s65 = int_to_ptr.hbm [resolvable:$true] %s64
      %s66 = sshll.u32 [#allocation10], 4
      %s67 = int_to_ptr.vmem [resolvable:$true] %s66
      %69 = dma.hbm_to_vmem [thread:$0]  %s65, 256, %s67, [#allocation11]
    $region21: #{adhoc_weighted_l2_forward.1} parent=1 // pred_fallthru
      _
    // Predicated region
    $region22: #{adhoc_weighted_l2_forward.1} parent=1 // pred_check
      _
    $region23: #{adhoc_weighted_l2_forward.1} parent=1 // pred_check_branch
      %71 = sbr.rel (0) target = $region25
    $region24: #{adhoc_weighted_l2_forward.1} parent=1 // pred_region
      %73 = dma.done [#allocation5], 16
    $region25: #{adhoc_weighted_l2_forward.1} parent=1 // pred_fallthru
      _
    // Predicated region
    $region26: #{adhoc_weighted_l2_forward.1} parent=1 // pred_check
      _
    $region27: #{adhoc_weighted_l2_forward.1} parent=1 // pred_check_branch
      %75 = sbr.rel (0) target = $region29
    $region28: #{adhoc_weighted_l2_forward.1} parent=1 // pred_region
      %77 = dma.done [#allocation3], 256
    $region29: #{adhoc_weighted_l2_forward.1} parent=1 // pred_fallthru
      _
    // Predicated region
    $region30: #{adhoc_weighted_l2_forward.1} parent=1 // pred_check
      _
    $region31: #{adhoc_weighted_l2_forward.1} parent=1 // pred_check_branch
      %79 = sbr.rel (0) target = $region33
    $region32: #{adhoc_weighted_l2_forward.1} parent=1 // pred_region
      %81 = dma.done [#allocation8], 256
    $region33: #{adhoc_weighted_l2_forward.1} parent=1 // pred_fallthru
      _
    // Predicated region
    $region34: #{adhoc_weighted_l2_forward.1} parent=1 // pred_check
      _
    $region35: #{adhoc_weighted_l2_forward.1} parent=1 // pred_check_branch
      %83 = sbr.rel (0) target = $region37
    $region36: #{adhoc_weighted_l2_forward.1} parent=1 // pred_region
      %85 = dma.done [#allocation8], 4096
    $region37: #{adhoc_weighted_l2_forward.1} parent=1 // pred_fallthru
      _
    // Predicated region
    $region38: #{adhoc_weighted_l2_forward.1} parent=1 // pred_check
      _
    $region39: #{adhoc_weighted_l2_forward.1} parent=1 // pred_check_branch
      %87 = sbr.rel (0) target = $region41
    $region40: #{adhoc_weighted_l2_forward.1} parent=1 // pred_region
      %89 = dma.done [#allocation11], 256
    $region41: #{adhoc_weighted_l2_forward.1} parent=1 // pred_fallthru
      _
    %90 = sfence
    %v91 = vld [vmem:[#allocation7] sm:$0xff]
    %v92 = vld [vmem:[#allocation7 + $0x8] sm:$0xff]
    %v93 = vld [vmem:[#allocation10] sm:$0xff]
    %v94 = vld [vmem:[#allocation10 + $0x8] sm:$0xff]
    %v95 = vmul.f32 %v91, %v93
    %v96 = vmul.f32 %v92, %v94
    %v97 = vld [vmem:[#allocation6] sm:$0xff]
    %v98 = vld [vmem:[#allocation6 + $0x8] sm:$0xff]
    loop: start=0, step=1, limit=10
    $region42: #{adhoc_weighted_l2_forward.1} parent=1 // loop_pre_header
      _
    $region43: #{adhoc_weighted_l2_forward.1} parent=1 // loop_header
      %s100 = sphi 0, %s104
      %p101 = scmp.ge.s32.totalorder %s100, 10
      %v105 = vphi %v97, %v632
      %v106 = vphi %v98, %v633
    $region44: #{adhoc_weighted_l2_forward.1} parent=1 // loop_header_branch
      %103 = sbr.rel (%p101) target = $region48
    $region45: #{adhoc_weighted_l2_forward.1} parent=1 // loop_body
      %s107 = smul.u32 %s100, 5
      %s108 = sld [smem:[#allocation2 + %s107]]
      %v109 = vstv %s108
      %v110 = vmul.f32 %v109, %v91
      %v111 = vmul.f32 %v109, %v92
      %v112 = vmul.f32 %v109, %v95
      %v113 = vmul.f32 %v109, %v96
      %v114 = vadd.f32 %v105, %v112
      %v115 = vadd.f32 %v106, %v113
      %v116 = vpack.c.bf16 %v105, %v105
      %v117 = vpack.c.bf16 %v106, %v106
      %v118 = vld [vmem:[#allocation9] sm:$0xff]
      %v119 = vld [vmem:[#allocation9 + $0x8] sm:$0xff]
      %v120 = vld [vmem:[#allocation9 + $0x10] sm:$0xff]
      %v121 = vld [vmem:[#allocation9 + $0x18] sm:$0xff]
      %v122 = vld [vmem:[#allocation9 + $0x20] sm:$0xff]
      %v123 = vld [vmem:[#allocation9 + $0x28] sm:$0xff]
      %v124 = vld [vmem:[#allocation9 + $0x30] sm:$0xff]
      %v125 = vld [vmem:[#allocation9 + $0x38] sm:$0xff]
      %v126 = vld [vmem:[#allocation9 + $0x40] sm:$0xff]
      %v127 = vld [vmem:[#allocation9 + $0x48] sm:$0xff]
      %v128 = vld [vmem:[#allocation9 + $0x50] sm:$0xff]
      %v129 = vld [vmem:[#allocation9 + $0x58] sm:$0xff]
      %v130 = vld [vmem:[#allocation9 + $0x60] sm:$0xff]
      %v131 = vld [vmem:[#allocation9 + $0x68] sm:$0xff]
      %v132 = vld [vmem:[#allocation9 + $0x70] sm:$0xff]
      %v133 = vld [vmem:[#allocation9 + $0x78] sm:$0xff]
      %v134 = vld [vmem:[#allocation9 + $0x80] sm:$0xff]
      %v135 = vld [vmem:[#allocation9 + $0x88] sm:$0xff]
      %v136 = vld [vmem:[#allocation9 + $0x90] sm:$0xff]
      %v137 = vld [vmem:[#allocation9 + $0x98] sm:$0xff]
      %v138 = vld [vmem:[#allocation9 + $0xa0] sm:$0xff]
      %v139 = vld [vmem:[#allocation9 + $0xa8] sm:$0xff]
      %v140 = vld [vmem:[#allocation9 + $0xb0] sm:$0xff]
      %v141 = vld [vmem:[#allocation9 + $0xb8] sm:$0xff]
      %v142 = vld [vmem:[#allocation9 + $0xc0] sm:$0xff]
      %v143 = vld [vmem:[#allocation9 + $0xc8] sm:$0xff]
      %v144 = vld [vmem:[#allocation9 + $0xd0] sm:$0xff]
      %v145 = vld [vmem:[#allocation9 + $0xd8] sm:$0xff]
      %v146 = vld [vmem:[#allocation9 + $0xe0] sm:$0xff]
      %v147 = vld [vmem:[#allocation9 + $0xe8] sm:$0xff]
      %v148 = vld [vmem:[#allocation9 + $0xf0] sm:$0xff]
      %v149 = vld [vmem:[#allocation9 + $0xf8] sm:$0xff]
      %v182 = vunpack.c.l.b16 %v118
      %v183 = vunpack.c.h.b16 %v118
      %v184 = vunpack.c.l.b16 %v119
      %v185 = vunpack.c.h.b16 %v119
      %v186 = vunpack.c.l.b16 %v120
      %v187 = vunpack.c.h.b16 %v120
      %v188 = vunpack.c.l.b16 %v121
      %v189 = vunpack.c.h.b16 %v121
      %v190 = vunpack.c.l.b16 %v122
      %v191 = vunpack.c.h.b16 %v122
      %v192 = vunpack.c.l.b16 %v123
      %v193 = vunpack.c.h.b16 %v123
      %v194 = vunpack.c.l.b16 %v124
      %v195 = vunpack.c.h.b16 %v124
      %v196 = vunpack.c.l.b16 %v125
      %v197 = vunpack.c.h.b16 %v125
      %v198 = vunpack.c.l.b16 %v126
      %v199 = vunpack.c.h.b16 %v126
      %v200 = vunpack.c.l.b16 %v127
      %v201 = vunpack.c.h.b16 %v127
      %v202 = vunpack.c.l.b16 %v128
      %v203 = vunpack.c.h.b16 %v128
      %v204 = vunpack.c.l.b16 %v129
      %v205 = vunpack.c.h.b16 %v129
      %v206 = vunpack.c.l.b16 %v130
      %v207 = vunpack.c.h.b16 %v130
      %v208 = vunpack.c.l.b16 %v131
      %v209 = vunpack.c.h.b16 %v131
      %v210 = vunpack.c.l.b16 %v132
      %v211 = vunpack.c.h.b16 %v132
      %v212 = vunpack.c.l.b16 %v133
      %v213 = vunpack.c.h.b16 %v133
      %v214 = vunpack.c.l.b16 %v134
      %v215 = vunpack.c.h.b16 %v134
      %v216 = vunpack.c.l.b16 %v135
      %v217 = vunpack.c.h.b16 %v135
      %v218 = vunpack.c.l.b16 %v136
      %v219 = vunpack.c.h.b16 %v136
      %v220 = vunpack.c.l.b16 %v137
      %v221 = vunpack.c.h.b16 %v137
      %v222 = vunpack.c.l.b16 %v138
      %v223 = vunpack.c.h.b16 %v138
      %v224 = vunpack.c.l.b16 %v139
      %v225 = vunpack.c.h.b16 %v139
      %v226 = vunpack.c.l.b16 %v140
      %v227 = vunpack.c.h.b16 %v140
      %v228 = vunpack.c.l.b16 %v141
      %v229 = vunpack.c.h.b16 %v141
      %v230 = vunpack.c.l.b16 %v142
      %v231 = vunpack.c.h.b16 %v142
      %v232 = vunpack.c.l.b16 %v143
      %v233 = vunpack.c.h.b16 %v143
      %v234 = vunpack.c.l.b16 %v144
      %v235 = vunpack.c.h.b16 %v144
      %v236 = vunpack.c.l.b16 %v145
      %v237 = vunpack.c.h.b16 %v145
      %v238 = vunpack.c.l.b16 %v146
      %v239 = vunpack.c.h.b16 %v146
      %v240 = vunpack.c.l.b16 %v147
      %v241 = vunpack.c.h.b16 %v147
      %v242 = vunpack.c.l.b16 %v148
      %v243 = vunpack.c.h.b16 %v148
      %v244 = vunpack.c.l.b16 %v149
      %v245 = vunpack.c.h.b16 %v149
      %v246 = vpack.c.b16 %v184, %v182
      %v247 = vpack.c.b16 %v185, %v183
      %v248 = vpack.c.b16 %v188, %v186
      %v249 = vpack.c.b16 %v189, %v187
      %v250 = vpack.c.b16 %v192, %v190
      %v251 = vpack.c.b16 %v193, %v191
      %v252 = vpack.c.b16 %v196, %v194
      %v253 = vpack.c.b16 %v197, %v195
      %v254 = vpack.c.b16 %v200, %v198
      %v255 = vpack.c.b16 %v201, %v199
      %v256 = vpack.c.b16 %v204, %v202
      %v257 = vpack.c.b16 %v205, %v203
      %v258 = vpack.c.b16 %v208, %v206
      %v259 = vpack.c.b16 %v209, %v207
      %v260 = vpack.c.b16 %v212, %v210
      %v261 = vpack.c.b16 %v213, %v211
      %v262 = vpack.c.b16 %v216, %v214
      %v263 = vpack.c.b16 %v217, %v215
      %v264 = vpack.c.b16 %v220, %v218
      %v265 = vpack.c.b16 %v221, %v219
      %v266 = vpack.c.b16 %v224, %v222
      %v267 = vpack.c.b16 %v225, %v223
      %v268 = vpack.c.b16 %v228, %v226
      %v269 = vpack.c.b16 %v229, %v227
      %v270 = vpack.c.b16 %v232, %v230
      %v271 = vpack.c.b16 %v233, %v231
      %v272 = vpack.c.b16 %v236, %v234
      %v273 = vpack.c.b16 %v237, %v235
      %v274 = vpack.c.b16 %v240, %v238
      %v275 = vpack.c.b16 %v241, %v239
      %v276 = vpack.c.b16 %v244, %v242
      %v277 = vpack.c.b16 %v245, %v243
      %310 = vmatpush.bf16.msra.mxu0 %v260
      %311 = vmatpush.bf16.msra.mxu0 %v258
      %312 = vmatpush.bf16.msra.mxu0 %v256
      %313 = vmatpush.bf16.msra.mxu0 %v254
      %314 = vmatpush.bf16.msra.mxu0 %v252
      %315 = vmatpush.bf16.msra.mxu0 %v250
      %316 = vmatpush.bf16.msra.mxu0 %v248
      %317 = vmatpush.bf16.msra.mxu0 %v246
      %318 = vmatmul.bf16.gmra.mxu0 %v116
      %v319 = vpop.f32.mrf.mxu0
      %v320 = vadd.f32 0.0, %v319
      %v321 = vpop.f32.mrf.mxu0
      %322 = vdwg.mxu0
      %323 = vmatpush.bf16.msra.mxu0 %v276
      %324 = vmatpush.bf16.msra.mxu0 %v274
      %325 = vmatpush.bf16.msra.mxu0 %v272
      %326 = vmatpush.bf16.msra.mxu0 %v270
      %327 = vmatpush.bf16.msra.mxu0 %v268
      %328 = vmatpush.bf16.msra.mxu0 %v266
      %329 = vmatpush.bf16.msra.mxu0 %v264
      %330 = vmatpush.bf16.msra.mxu0 %v262
      %331 = vmatmul.bf16.gmra.mxu0 %v117
      %v332 = vpop.f32.mrf.mxu0
      %v333 = vadd.f32 %v320, %v332
      %v334 = vpop.f32.mrf.mxu0
      %335 = vdwg.mxu0
      %336 = vmatpush.bf16.msra.mxu0 %v261
      %337 = vmatpush.bf16.msra.mxu0 %v259
      %338 = vmatpush.bf16.msra.mxu0 %v257
      %339 = vmatpush.bf16.msra.mxu0 %v255
      %340 = vmatpush.bf16.msra.mxu0 %v253
      %341 = vmatpush.bf16.msra.mxu0 %v251
      %342 = vmatpush.bf16.msra.mxu0 %v249
      %343 = vmatpush.bf16.msra.mxu0 %v247
      %344 = vmatmul.bf16.gmra.mxu0 %v116
      %v345 = vpop.f32.mrf.mxu0
      %v346 = vadd.f32 0.0, %v345
      %v347 = vpop.f32.mrf.mxu0
      %348 = vdwg.mxu0
      %349 = vmatpush.bf16.msra.mxu0 %v277
      %350 = vmatpush.bf16.msra.mxu0 %v275
      %351 = vmatpush.bf16.msra.mxu0 %v273
      %352 = vmatpush.bf16.msra.mxu0 %v271
      %353 = vmatpush.bf16.msra.mxu0 %v269
      %354 = vmatpush.bf16.msra.mxu0 %v267
      %355 = vmatpush.bf16.msra.mxu0 %v265
      %356 = vmatpush.bf16.msra.mxu0 %v263
      %357 = vmatmul.bf16.gmra.mxu0 %v117
      %v358 = vpop.f32.mrf.mxu0
      %v359 = vadd.f32 %v346, %v358
      %v360 = vpop.f32.mrf.mxu0
      %361 = vdwg.mxu0
      %v362 = vmul.f32 %v110, %v333
      %v363 = vmul.f32 %v111, %v359
      %v364 = vsub.f32 %v114, %v362
      %v365 = vsub.f32 %v115, %v363
      %s366 = sadd.s32 %s107, 1
      %s367 = sld [smem:[#allocation2 + %s366]]
      %v368 = vstv %s367
      %v369 = vmul.f32 %v368, %v91
      %v370 = vmul.f32 %v368, %v92
      %v371 = vmul.f32 %v368, %v95
      %v372 = vmul.f32 %v368, %v96
      %v373 = vadd.f32 %v364, %v371
      %v374 = vadd.f32 %v365, %v372
      %v375 = vpack.c.bf16 %v364, %v364
      %v376 = vpack.c.bf16 %v365, %v365
      %377 = vmatpush.bf16.msra.mxu0 %v260
      %378 = vmatpush.bf16.msra.mxu0 %v258
      %379 = vmatpush.bf16.msra.mxu0 %v256
      %380 = vmatpush.bf16.msra.mxu0 %v254
      %381 = vmatpush.bf16.msra.mxu0 %v252
      %382 = vmatpush.bf16.msra.mxu0 %v250
      %383 = vmatpush.bf16.msra.mxu0 %v248
      %384 = vmatpush.bf16.msra.mxu0 %v246
      %385 = vmatmul.bf16.gmra.mxu0 %v375
      %v386 = vpop.f32.mrf.mxu0
      %v387 = vadd.f32 0.0, %v386
      %v388 = vpop.f32.mrf.mxu0
      %389 = vdwg.mxu0
      %390 = vmatpush.bf16.msra.mxu0 %v276
      %391 = vmatpush.bf16.msra.mxu0 %v274
      %392 = vmatpush.bf16.msra.mxu0 %v272
      %393 = vmatpush.bf16.msra.mxu0 %v270
      %394 = vmatpush.bf16.msra.mxu0 %v268
      %395 = vmatpush.bf16.msra.mxu0 %v266
      %396 = vmatpush.bf16.msra.mxu0 %v264
      %397 = vmatpush.bf16.msra.mxu0 %v262
      %398 = vmatmul.bf16.gmra.mxu0 %v376
      %v399 = vpop.f32.mrf.mxu0
      %v400 = vadd.f32 %v387, %v399
      %v401 = vpop.f32.mrf.mxu0
      %402 = vdwg.mxu0
      %403 = vmatpush.bf16.msra.mxu0 %v261
      %404 = vmatpush.bf16.msra.mxu0 %v259
      %405 = vmatpush.bf16.msra.mxu0 %v257
      %406 = vmatpush.bf16.msra.mxu0 %v255
      %407 = vmatpush.bf16.msra.mxu0 %v253
      %408 = vmatpush.bf16.msra.mxu0 %v251
      %409 = vmatpush.bf16.msra.mxu0 %v249
      %410 = vmatpush.bf16.msra.mxu0 %v247
      %411 = vmatmul.bf16.gmra.mxu0 %v375
      %v412 = vpop.f32.mrf.mxu0
      %v413 = vadd.f32 0.0, %v412
      %v414 = vpop.f32.mrf.mxu0
      %415 = vdwg.mxu0
      %416 = vmatpush.bf16.msra.mxu0 %v277
      %417 = vmatpush.bf16.msra.mxu0 %v275
      %418 = vmatpush.bf16.msra.mxu0 %v273
      %419 = vmatpush.bf16.msra.mxu0 %v271
      %420 = vmatpush.bf16.msra.mxu0 %v269
      %421 = vmatpush.bf16.msra.mxu0 %v267
      %422 = vmatpush.bf16.msra.mxu0 %v265
      %423 = vmatpush.bf16.msra.mxu0 %v263
      %424 = vmatmul.bf16.gmra.mxu0 %v376
      %v425 = vpop.f32.mrf.mxu0
      %v426 = vadd.f32 %v413, %v425
      %v427 = vpop.f32.mrf.mxu0
      %428 = vdwg.mxu0
      %v429 = vmul.f32 %v369, %v400
      %v430 = vmul.f32 %v370, %v426
      %v431 = vsub.f32 %v373, %v429
      %v432 = vsub.f32 %v374, %v430
      %s433 = sadd.s32 %s107, 2
      %s434 = sld [smem:[#allocation2 + %s433]]
      %v435 = vstv %s434
      %v436 = vmul.f32 %v435, %v91
      %v437 = vmul.f32 %v435, %v92
      %v438 = vmul.f32 %v435, %v95
      %v439 = vmul.f32 %v435, %v96
      %v440 = vadd.f32 %v431, %v438
      %v441 = vadd.f32 %v432, %v439
      %v442 = vpack.c.bf16 %v431, %v431
      %v443 = vpack.c.bf16 %v432, %v432
      %444 = vmatpush.bf16.msra.mxu0 %v260
      %445 = vmatpush.bf16.msra.mxu0 %v258
      %446 = vmatpush.bf16.msra.mxu0 %v256
      %447 = vmatpush.bf16.msra.mxu0 %v254
      %448 = vmatpush.bf16.msra.mxu0 %v252
      %449 = vmatpush.bf16.msra.mxu0 %v250
      %450 = vmatpush.bf16.msra.mxu0 %v248
      %451 = vmatpush.bf16.msra.mxu0 %v246
      %452 = vmatmul.bf16.gmra.mxu0 %v442
      %v453 = vpop.f32.mrf.mxu0
      %v454 = vadd.f32 0.0, %v453
      %v455 = vpop.f32.mrf.mxu0
      %456 = vdwg.mxu0
      %457 = vmatpush.bf16.msra.mxu0 %v276
      %458 = vmatpush.bf16.msra.mxu0 %v274
      %459 = vmatpush.bf16.msra.mxu0 %v272
      %460 = vmatpush.bf16.msra.mxu0 %v270
      %461 = vmatpush.bf16.msra.mxu0 %v268
      %462 = vmatpush.bf16.msra.mxu0 %v266
      %463 = vmatpush.bf16.msra.mxu0 %v264
      %464 = vmatpush.bf16.msra.mxu0 %v262
      %465 = vmatmul.bf16.gmra.mxu0 %v443
      %v466 = vpop.f32.mrf.mxu0
      %v467 = vadd.f32 %v454, %v466
      %v468 = vpop.f32.mrf.mxu0
      %469 = vdwg.mxu0
      %470 = vmatpush.bf16.msra.mxu0 %v261
      %471 = vmatpush.bf16.msra.mxu0 %v259
      %472 = vmatpush.bf16.msra.mxu0 %v257
      %473 = vmatpush.bf16.msra.mxu0 %v255
      %474 = vmatpush.bf16.msra.mxu0 %v253
      %475 = vmatpush.bf16.msra.mxu0 %v251
      %476 = vmatpush.bf16.msra.mxu0 %v249
      %477 = vmatpush.bf16.msra.mxu0 %v247
      %478 = vmatmul.bf16.gmra.mxu0 %v442
      %v479 = vpop.f32.mrf.mxu0
      %v480 = vadd.f32 0.0, %v479
      %v481 = vpop.f32.mrf.mxu0
      %482 = vdwg.mxu0
      %483 = vmatpush.bf16.msra.mxu0 %v277
      %484 = vmatpush.bf16.msra.mxu0 %v275
      %485 = vmatpush.bf16.msra.mxu0 %v273
      %486 = vmatpush.bf16.msra.mxu0 %v271
      %487 = vmatpush.bf16.msra.mxu0 %v269
      %488 = vmatpush.bf16.msra.mxu0 %v267
      %489 = vmatpush.bf16.msra.mxu0 %v265
      %490 = vmatpush.bf16.msra.mxu0 %v263
      %491 = vmatmul.bf16.gmra.mxu0 %v443
      %v492 = vpop.f32.mrf.mxu0
      %v493 = vadd.f32 %v480, %v492
      %v494 = vpop.f32.mrf.mxu0
      %495 = vdwg.mxu0
      %v496 = vmul.f32 %v436, %v467
      %v497 = vmul.f32 %v437, %v493
      %v498 = vsub.f32 %v440, %v496
      %v499 = vsub.f32 %v441, %v497
      %s500 = sadd.s32 %s107, 3
      %s501 = sld [smem:[#allocation2 + %s500]]
      %v502 = vstv %s501
      %v503 = vmul.f32 %v502, %v91
      %v504 = vmul.f32 %v502, %v92
      %v505 = vmul.f32 %v502, %v95
      %v506 = vmul.f32 %v502, %v96
      %v507 = vadd.f32 %v498, %v505
      %v508 = vadd.f32 %v499, %v506
      %v509 = vpack.c.bf16 %v498, %v498
      %v510 = vpack.c.bf16 %v499, %v499
      %511 = vmatpush.bf16.msra.mxu0 %v260
      %512 = vmatpush.bf16.msra.mxu0 %v258
      %513 = vmatpush.bf16.msra.mxu0 %v256
      %514 = vmatpush.bf16.msra.mxu0 %v254
      %515 = vmatpush.bf16.msra.mxu0 %v252
      %516 = vmatpush.bf16.msra.mxu0 %v250
      %517 = vmatpush.bf16.msra.mxu0 %v248
      %518 = vmatpush.bf16.msra.mxu0 %v246
      %519 = vmatmul.bf16.gmra.mxu0 %v509
      %v520 = vpop.f32.mrf.mxu0
      %v521 = vadd.f32 0.0, %v520
      %v522 = vpop.f32.mrf.mxu0
      %523 = vdwg.mxu0
      %524 = vmatpush.bf16.msra.mxu0 %v276
      %525 = vmatpush.bf16.msra.mxu0 %v274
      %526 = vmatpush.bf16.msra.mxu0 %v272
      %527 = vmatpush.bf16.msra.mxu0 %v270
      %528 = vmatpush.bf16.msra.mxu0 %v268
      %529 = vmatpush.bf16.msra.mxu0 %v266
      %530 = vmatpush.bf16.msra.mxu0 %v264
      %531 = vmatpush.bf16.msra.mxu0 %v262
      %532 = vmatmul.bf16.gmra.mxu0 %v510
      %v533 = vpop.f32.mrf.mxu0
      %v534 = vadd.f32 %v521, %v533
      %v535 = vpop.f32.mrf.mxu0
      %536 = vdwg.mxu0
      %537 = vmatpush.bf16.msra.mxu0 %v261
      %538 = vmatpush.bf16.msra.mxu0 %v259
      %539 = vmatpush.bf16.msra.mxu0 %v257
      %540 = vmatpush.bf16.msra.mxu0 %v255
      %541 = vmatpush.bf16.msra.mxu0 %v253
      %542 = vmatpush.bf16.msra.mxu0 %v251
      %543 = vmatpush.bf16.msra.mxu0 %v249
      %544 = vmatpush.bf16.msra.mxu0 %v247
      %545 = vmatmul.bf16.gmra.mxu0 %v509
      %v546 = vpop.f32.mrf.mxu0
      %v547 = vadd.f32 0.0, %v546
      %v548 = vpop.f32.mrf.mxu0
      %549 = vdwg.mxu0
      %550 = vmatpush.bf16.msra.mxu0 %v277
      %551 = vmatpush.bf16.msra.mxu0 %v275
      %552 = vmatpush.bf16.msra.mxu0 %v273
      %553 = vmatpush.bf16.msra.mxu0 %v271
      %554 = vmatpush.bf16.msra.mxu0 %v269
      %555 = vmatpush.bf16.msra.mxu0 %v267
      %556 = vmatpush.bf16.msra.mxu0 %v265
      %557 = vmatpush.bf16.msra.mxu0 %v263
      %558 = vmatmul.bf16.gmra.mxu0 %v510
      %v559 = vpop.f32.mrf.mxu0
      %v560 = vadd.f32 %v547, %v559
      %v561 = vpop.f32.mrf.mxu0
      %562 = vdwg.mxu0
      %v563 = vmul.f32 %v503, %v534
      %v564 = vmul.f32 %v504, %v560
      %v565 = vsub.f32 %v507, %v563
      %v566 = vsub.f32 %v508, %v564
      %s567 = sadd.s32 %s107, 4
      %s568 = sld [smem:[#allocation2 + %s567]]
      %v569 = vstv %s568
      %v570 = vmul.f32 %v569, %v91
      %v571 = vmul.f32 %v569, %v92
      %v572 = vmul.f32 %v569, %v95
      %v573 = vmul.f32 %v569, %v96
      %v574 = vadd.f32 %v565, %v572
      %v575 = vadd.f32 %v566, %v573
      %v576 = vpack.c.bf16 %v565, %v565
      %v577 = vpack.c.bf16 %v566, %v566
      %578 = vmatpush.bf16.msra.mxu0 %v260
      %579 = vmatpush.bf16.msra.mxu0 %v258
      %580 = vmatpush.bf16.msra.mxu0 %v256
      %581 = vmatpush.bf16.msra.mxu0 %v254
      %582 = vmatpush.bf16.msra.mxu0 %v252
      %583 = vmatpush.bf16.msra.mxu0 %v250
      %584 = vmatpush.bf16.msra.mxu0 %v248
      %585 = vmatpush.bf16.msra.mxu0 %v246
      %586 = vmatmul.bf16.gmra.mxu0 %v576
      %v587 = vpop.f32.mrf.mxu0
      %v588 = vadd.f32 0.0, %v587
      %v589 = vpop.f32.mrf.mxu0
      %590 = vdwg.mxu0
      %591 = vmatpush.bf16.msra.mxu0 %v276
      %592 = vmatpush.bf16.msra.mxu0 %v274
      %593 = vmatpush.bf16.msra.mxu0 %v272
      %594 = vmatpush.bf16.msra.mxu0 %v270
      %595 = vmatpush.bf16.msra.mxu0 %v268
      %596 = vmatpush.bf16.msra.mxu0 %v266
      %597 = vmatpush.bf16.msra.mxu0 %v264
      %598 = vmatpush.bf16.msra.mxu0 %v262
      %599 = vmatmul.bf16.gmra.mxu0 %v577
      %v600 = vpop.f32.mrf.mxu0
      %v601 = vadd.f32 %v588, %v600
      %v602 = vpop.f32.mrf.mxu0
      %603 = vdwg.mxu0
      %604 = vmatpush.bf16.msra.mxu0 %v261
      %605 = vmatpush.bf16.msra.mxu0 %v259
      %606 = vmatpush.bf16.msra.mxu0 %v257
      %607 = vmatpush.bf16.msra.mxu0 %v255
      %608 = vmatpush.bf16.msra.mxu0 %v253
      %609 = vmatpush.bf16.msra.mxu0 %v251
      %610 = vmatpush.bf16.msra.mxu0 %v249
      %611 = vmatpush.bf16.msra.mxu0 %v247
      %612 = vmatmul.bf16.gmra.mxu0 %v576
      %v613 = vpop.f32.mrf.mxu0
      %v614 = vadd.f32 0.0, %v613
      %v615 = vpop.f32.mrf.mxu0
      %616 = vdwg.mxu0
      %617 = vmatpush.bf16.msra.mxu0 %v277
      %618 = vmatpush.bf16.msra.mxu0 %v275
      %619 = vmatpush.bf16.msra.mxu0 %v273
      %620 = vmatpush.bf16.msra.mxu0 %v271
      %621 = vmatpush.bf16.msra.mxu0 %v269
      %622 = vmatpush.bf16.msra.mxu0 %v267
      %623 = vmatpush.bf16.msra.mxu0 %v265
      %624 = vmatpush.bf16.msra.mxu0 %v263
      %625 = vmatmul.bf16.gmra.mxu0 %v577
      %v626 = vpop.f32.mrf.mxu0
      %v627 = vadd.f32 %v614, %v626
      %v628 = vpop.f32.mrf.mxu0
      %629 = vdwg.mxu0
      %v630 = vmul.f32 %v570, %v601
      %v631 = vmul.f32 %v571, %v627
      %v632 = vsub.f32 %v574, %v630
      %v633 = vsub.f32 %v575, %v631
    $region46: #{adhoc_weighted_l2_forward.1} parent=1 // loop_footer
      %s104 = sadd.s32 1, %s100
    $region47: #{adhoc_weighted_l2_forward.1} parent=1 // loop_footer_branch
      %99 = sbr.rel target = $region43
    $region48: #{adhoc_weighted_l2_forward.1} parent=1 // loop_exit
      _
    %634 = vst [vmem:[#allocation12] sm:$0xff] %v105
    %635 = vst [vmem:[#allocation12 + $0x8] sm:$0xff] %v106
    // Predicated region
    $region49: #{adhoc_weighted_l2_forward.1} parent=1 // pred_check
      _
    $region50: #{adhoc_weighted_l2_forward.1} parent=1 // pred_check_branch
      %637 = sbr.rel (0) target = $region52
    $region51: #{adhoc_weighted_l2_forward.1} parent=1 // pred_region
      %639 = vsyncadd [#allocation4], 0
      %s641 = sshll.u32 [#allocation12], 4
      %s642 = int_to_ptr.vmem [resolvable:$true] %s641
      %s643 = sshll.u32 %s5, 4
      %s644 = int_to_ptr.hbm [resolvable:$true] %s643
      %646 = dma.vmem_to_hbm [thread:$0]  %s642, 256, %s644, [#allocation4]
    $region52: #{adhoc_weighted_l2_forward.1} parent=1 // pred_fallthru
      _
    // Predicated region
    $region53: #{adhoc_weighted_l2_forward.1} parent=1 // pred_check
      _
    $region54: #{adhoc_weighted_l2_forward.1} parent=1 // pred_check_branch
      %648 = sbr.rel (0) target = $region56
    $region55: #{adhoc_weighted_l2_forward.1} parent=1 // pred_region
      %650 = dma.done [#allocation4], 256
    $region56: #{adhoc_weighted_l2_forward.1} parent=1 // pred_fallthru
      _
    %651 = vsyncpa [#allocation3], 1
    %652 = vsyncpa [#allocation8], 1
    %653 = vsyncpa [#allocation11], 1
    %654 = vsyncpa [#allocation4], 1
    %655 = vsyncpa [#allocation5], 1

</llo_original>
